<compile_context>
chip_gen: v7x
topology: tpu7x:2x2x1
jax: 0.10.0
libtpu: 0.0.40
codegen_flags: <defaults>
</compile_context>

<pallas_src>
import functools

import jax
import jax.numpy as jnp
import numpy as np
from jax import lax
from jax.experimental import pallas as pl
from jax.experimental.pallas import tpu as pltpu


def _round_up(x, m):
    return (x + m - 1) // m * m


def _focal_loss_kernel(*refs, gamma, has_alpha, n_valid, tile_m, c):
    """One grid step: rows [i*tile_m, (i+1)*tile_m) of the (N, C) problem.

    Writes a (1, 8, c) partial-sum slab (rows folded mod 8 with pure VPU adds);
    the final cross-lane/sublane reduction happens once in the wrapper.
    """
    if has_alpha:
        pred_ref, label_ref, alpha_ref, out_ref = refs
    else:
        pred_ref, label_ref, out_ref = refs
        alpha_ref = None

    x = pred_ref[...].astype(jnp.float32)
    y = label_ref[...].astype(jnp.float32)

    # Numerically stable BCE-with-logits (torch formulation):
    #   max(x, 0) - x*y + log(1 + exp(-|x|))
    e = jnp.exp(-jnp.abs(x))
    bce = jnp.maximum(x, 0.0) - x * y + jnp.log1p(e)
    # TODO(synk): for hard {0,1} labels pt could reuse `e` (sigmoid form, saves one EUP
    # exp/elem); the general exp(-bce) path is kept so soft labels stay exact.
    pt = jnp.exp(-bce)

    g = float(gamma)
    if g == 0.0:
        focal = bce                              # (1 - pt)**0 == 1 (torch: 0**0 == 1)
    elif g.is_integer():
        focal = (1.0 - pt) ** int(g) * bce       # lax.integer_pow: repeated mults, no EUP pow
    else:
        focal = (1.0 - pt) ** g * bce            # non-integer gamma fallback

    if has_alpha:
        focal = alpha_ref[...].astype(jnp.float32) * focal   # (tile_m, 1) bcast over C

    if n_valid is not None:
        # Mask padded tail rows (only emitted when N was padded).
        base = pl.program_id(0) * tile_m
        rows = lax.broadcasted_iota(jnp.int32, (tile_m, c), 0) + base
        focal = jnp.where(rows < n_valid, focal, 0.0)

    out_ref[...] = focal.reshape(tile_m // 8, 8, c).sum(axis=0, keepdims=True)


def focal_loss(pred, label, gamma=0.0, alpha=None, *,
               block_rows=512, vmem_block_budget_bytes=8 * 1024 * 1024):
    """Pallas TPU implementation of FocalLoss.forward. Returns a scalar."""
    assert pred.shape == label.shape and pred.ndim == 2
    n, c = pred.shape

    # Row tile: as large as the VMEM budget allows (2 inputs x 2 pipeline buffers,
    # in the native input dtype), clamped to what the batch actually needs.
    itemsize = max(jnp.dtype(pred.dtype).itemsize, jnp.dtype(label.dtype).itemsize)
    bytes_per_row = 2 * 2 * c * itemsize
    max_rows = max(8, (vmem_block_budget_bytes // bytes_per_row) // 8 * 8)
    tile_m = int(min(max(8, (block_rows // 8) * 8), max_rows, _round_up(n, 8)))
    n_pad = _round_up(n, tile_m)
    num_blocks = n_pad // tile_m

    pred_p, label_p = pred, label
    if n_pad != n:
        pred_p = jnp.pad(pred, ((0, n_pad - n), (0, 0)))
        label_p = jnp.pad(label, ((0, n_pad - n), (0, 0)))

    # alpha handling: None -> no input / no multiply at all; size-1 -> fold into the
    # final scale; per-row column -> (n_pad, 1) side input broadcast over classes.
    args = [pred_p, label_p]
    in_specs = [
        pl.BlockSpec((tile_m, c), lambda i: (i, 0)),
        pl.BlockSpec((tile_m, c), lambda i: (i, 0)),
    ]
    has_alpha = False
    alpha_scale = None
    if alpha is not None:
        a_col = jnp.asarray(alpha, jnp.float32).reshape(-1, 1)
        if a_col.shape[0] == 1:
            alpha_scale = a_col.reshape(())
        else:
            assert a_col.shape[0] == n, "alpha column must broadcast against rows"
            if n_pad != n:
                a_col = jnp.pad(a_col, ((0, n_pad - n), (0, 0)))
            args.append(a_col)
            in_specs.append(pl.BlockSpec((tile_m, 1), lambda i: (i, 0)))
            has_alpha = True

    kernel = functools.partial(
        _focal_loss_kernel,
        gamma=float(gamma),
        has_alpha=has_alpha,
        n_valid=(n if n_pad != n else None),
        tile_m=tile_m,
        c=c,
    )

    partials = pl.pallas_call(
        kernel,
        out_shape=jax.ShapeDtypeStruct((num_blocks, 8, c), jnp.float32),
        grid_spec=pltpu.PrefetchScalarGridSpec(
            num_scalar_prefetch=0,
            grid=(num_blocks,),
            in_specs=in_specs,
            out_specs=pl.BlockSpec((1, 8, c), lambda i: (i, 0, 0)),
        ),
        compiler_params=pltpu.CompilerParams(
            dimension_semantics=("parallel",)),
    )(*args)

    loss = jnp.sum(partials) * (1.0 / float(n * c))
    if alpha_scale is not None:
        loss = loss * alpha_scale
    return loss


def _focal_loss_ref(pred, label, gamma=0.0, alpha=None):
    x = pred.astype(jnp.float32)
    y = label.astype(jnp.float32)
    bce = jnp.maximum(x, 0.0) - x * y + jnp.log1p(jnp.exp(-jnp.abs(x)))
    pt = jnp.exp(-bce)
    a = 1.0 if alpha is None else jnp.asarray(alpha, jnp.float32).reshape(-1, 1)
    if gamma == 0:
        fl = a * bce
    else:
        fl = a * (1.0 - pt) ** gamma * bce
    return jnp.mean(fl)


if __name__ == "__main__":
    key = jax.random.PRNGKey(0)
    k1, k2, k3 = jax.random.split(key, 3)

    N, C = 16, 128  # small multi-label setting (batch=16, 128 classes)
    pred = jax.random.normal(k1, (N, C), jnp.float32) * 2.0
    label = (jax.random.uniform(k2, (N, C)) > 0.5).astype(jnp.float32)

    # gamma=2 exercises the focal term; alpha=None -> specialized no-alpha path
    out = jax.block_until_ready(focal_loss(pred, label, gamma=2.0, alpha=None))
    ref = _focal_loss_ref(pred, label, gamma=2.0, alpha=None)
    assert np.allclose(np.asarray(out), np.asarray(ref), rtol=1e-5, atol=1e-6), (out, ref)

    # gamma=0 default path
    out0 = jax.block_until_ready(focal_loss(pred, label, gamma=0.0, alpha=None))
    ref0 = _focal_loss_ref(pred, label, gamma=0.0, alpha=None)
    assert np.allclose(np.asarray(out0), np.asarray(ref0), rtol=1e-5, atol=1e-6), (out0, ref0)

    # per-row alpha + a batch that is NOT a multiple of 8 (exercises the padding mask)
    N2 = 13
    pred2 = jax.random.normal(k3, (N2, C), jnp.float32) * 2.0
    label2 = (jax.random.uniform(k2, (N2, C)) > 0.5).astype(jnp.float32)
    alpha2 = np.linspace(0.1, 1.0, N2).astype(np.float32)
    out2 = jax.block_until_ready(focal_loss(pred2, label2, gamma=2.0, alpha=alpha2))
    ref2 = _focal_loss_ref(pred2, label2, gamma=2.0, alpha=alpha2)
    assert np.allclose(np.asarray(out2), np.asarray(ref2), rtol=1e-5, atol=1e-6), (out2, ref2)

    print("KERNEL_OK")
</pallas_src>

<mosaic_0001>
module attributes {stable_mosaic.version = 11 : i64} {
  func.func @_focal_loss_kernel(%arg0: i32, %arg1: memref<16x128xf32, #tpu.memory_space<vmem>>, %arg2: memref<16x128xf32, #tpu.memory_space<vmem>>, %arg3: memref<1x8x128xf32, #tpu.memory_space<vmem>>) attributes {dimension_semantics = [#tpu.dimension_semantics<parallel>], iteration_bounds = array<i64: 1>, scalar_prefetch = 0 : i64, scratch_operands = 0 : i64, tpu.core_type = #tpu.core_type<tc>, window_params = [{transform_indices = @transform_0, window_bounds = array<i64: 16, 128>}, {transform_indices = @transform_1, window_bounds = array<i64: 16, 128>}, {transform_indices = @transform_2, window_bounds = array<i64: 1, 8, 128>}]} {
    %c0 = arith.constant 0 : index
    %c0_0 = arith.constant 0 : index
    %0 = vector.load %arg1[%c0, %c0_0] : memref<16x128xf32, #tpu.memory_space<vmem>>, vector<16x128xf32>
    %c0_1 = arith.constant 0 : index
    %c0_2 = arith.constant 0 : index
    %1 = vector.load %arg2[%c0_1, %c0_2] : memref<16x128xf32, #tpu.memory_space<vmem>>, vector<16x128xf32>
    %2 = math.absf %0 : vector<16x128xf32>
    %cst = arith.constant 0.000000e+00 : f32
    %3 = vector.broadcast %cst : f32 to vector<16x128xf32>
    %4 = arith.subf %3, %2 : vector<16x128xf32>
    %5 = math.exp %4 : vector<16x128xf32>
    %cst_3 = arith.constant 0.000000e+00 : f32
    %6 = vector.broadcast %cst_3 : f32 to vector<16x128xf32>
    %7 = arith.maximumf %0, %6 : vector<16x128xf32>
    %8 = arith.mulf %0, %1 : vector<16x128xf32>
    %9 = arith.subf %7, %8 : vector<16x128xf32>
    %10 = math.log1p %5 : vector<16x128xf32>
    %11 = arith.addf %9, %10 : vector<16x128xf32>
    %cst_4 = arith.constant 0.000000e+00 : f32
    %12 = vector.broadcast %cst_4 : f32 to vector<16x128xf32>
    %13 = arith.subf %12, %11 : vector<16x128xf32>
    %14 = math.exp %13 : vector<16x128xf32>
    %cst_5 = arith.constant 1.000000e+00 : f32
    %15 = vector.broadcast %cst_5 : f32 to vector<16x128xf32>
    %16 = arith.subf %15, %14 : vector<16x128xf32>
    %17 = arith.mulf %16, %16 : vector<16x128xf32>
    %18 = arith.mulf %17, %11 : vector<16x128xf32>
    %19 = vector.shape_cast %18 : vector<16x128xf32> to vector<2x8x128xf32>
    %cst_6 = arith.constant dense<0.000000e+00> : vector<8x128xf32>
    %20 = vector.multi_reduction <add>, %19, %cst_6 [0] : vector<2x8x128xf32> to vector<8x128xf32>
    %21 = vector.shape_cast %20 : vector<8x128xf32> to vector<1x8x128xf32>
    %c0_7 = arith.constant 0 : index
    %c0_8 = arith.constant 0 : index
    %c0_9 = arith.constant 0 : index
    %22 = vector.load %arg3[%c0_7, %c0_8, %c0_9] : memref<1x8x128xf32, #tpu.memory_space<vmem>>, vector<1x8x128xf32>
    tpu.vector_store %arg3[%c0_7, %c0_8, %c0_9], %21 {strides = array<i32>} : memref<1x8x128xf32, #tpu.memory_space<vmem>>, vector<1x8x128xf32>,
    return
  }
  func.func @transform_0(%arg0: i32) -> (i32, i32) {
    %c0_i32 = arith.constant 0 : i32
    %c0_i32_0 = arith.constant 0 : i32
    return %arg0, %c0_i32 : i32, i32
  }
  func.func @transform_1(%arg0: i32) -> (i32, i32) {
    %c0_i32 = arith.constant 0 : i32
    %c0_i32_0 = arith.constant 0 : i32
    return %arg0, %c0_i32 : i32, i32
  }
  func.func @transform_2(%arg0: i32) -> (i32, i32, i32) {
    %c0_i32 = arith.constant 0 : i32
    %c0_i32_0 = arith.constant 0 : i32
    %c0_i32_1 = arith.constant 0 : i32
    return %arg0, %c0_i32, %c0_i32_0 : i32, i32, i32
  }
}

</mosaic_0001>

<llo_original>
// kernel: tpu_custom_call.1
$region0: #{tpu_custom_call.1}
  #allocation0 [shape = 'u32[]', space=smem, size = 0x4, offset = 0x4, fixed_abs, tag = 'smem constant byte address 0x4 - core index']
  #allocation1 [shape = 'u32[144,128]{1,0:T(1,128)}', space=vmem, size = 0x12000, scoped, tag = 'internal scratch']
  %s0 = inlined_call_operand.hbm [shape: f32[16,128], index: 0, kind: input, shape index: {}]
  %s1 = inlined_call_operand.hbm [shape: f32[16,128], index: 1, kind: input, shape index: {}]
  %s2 = inlined_call_operand.hbm [shape: f32[1,8,128], index: 2, kind: output, shape index: {}]
  %s3 = sld [smem:[#allocation0]]
  $region26: #{tpu_custom_call.1} parent=0
    _
  %s5 = ssub.s32 1, %s3
  %s6 = scalar_select 0, %s5, %s3
  $region1: #{tpu_custom_call.1} parent=0
    #allocation2 [shape = 'u8[8192]{0}', space=vmem, size = 0x2000, scoped, tag = 'input window, operand 0, single buffered']
    #allocation3 [shape = 's32[1]{0}', space=sflag, size = 0x4, scoped, tag = 'scoped memory for tpu_custom_call.1']
    #allocation4 [shape = 's32[1]{0}', space=sflag, size = 0x4, scoped, tag = 'scoped memory for tpu_custom_call.1']
    #allocation5 [shape = 'u8[8192]{0}', space=vmem, size = 0x2000, scoped, tag = 'input window, operand 1, single buffered']
    #allocation6 [shape = 's32[1]{0}', space=sflag, size = 0x4, scoped, tag = 'scoped memory for tpu_custom_call.1']
    #allocation7 [shape = 'u8[4096]{0}', space=vmem, size = 0x1000, scoped, tag = 'output window, operand 0, single buffered']
    %7 = vsyncpa [#allocation3], 0
    %8 = vsyncpa [#allocation6], 0
    %9 = vsyncpa [#allocation4], 0
    // Predicated region
    $region2: #{tpu_custom_call.1} parent=1 // pred_check
      _
    $region3: #{tpu_custom_call.1} parent=1 // pred_check_branch
      %11 = sbr.rel (0) target = $region5
    $region4: #{tpu_custom_call.1} parent=1 // pred_region
      %s13 = ssub.s32 256, 256
      %14 = vsyncadd [#allocation3], %s13
      %s15 = sshll.u32 [#allocation2], 4
      %s16 = int_to_ptr.vmem [resolvable:$true] %s15
      %21 = dma.hbm_to_vmem [thread:$0]  %s0, 256, %s16, [#allocation3], 128, 128, 8
    $region5: #{tpu_custom_call.1} parent=1 // pred_fallthru
      _
    // Predicated region
    $region6: #{tpu_custom_call.1} parent=1 // pred_check
      _
    $region7: #{tpu_custom_call.1} parent=1 // pred_check_branch
      %23 = sbr.rel (0) target = $region9
    $region8: #{tpu_custom_call.1} parent=1 // pred_region
      %s25 = ssub.s32 256, 256
      %26 = vsyncadd [#allocation6], %s25
      %s27 = sshll.u32 [#allocation5], 4
      %s28 = int_to_ptr.vmem [resolvable:$true] %s27
      %33 = dma.hbm_to_vmem [thread:$0]  %s1, 256, %s28, [#allocation6], 128, 128, 8
    $region9: #{tpu_custom_call.1} parent=1 // pred_fallthru
      _
    // Predicated region
    $region10: #{tpu_custom_call.1} parent=1 // pred_check
      _
    $region11: #{tpu_custom_call.1} parent=1 // pred_check_branch
      %35 = sbr.rel (0) target = $region13
    $region12: #{tpu_custom_call.1} parent=1 // pred_region
      %36 = dma.done [#allocation3], 256
    $region13: #{tpu_custom_call.1} parent=1 // pred_fallthru
      _
    // Predicated region
    $region14: #{tpu_custom_call.1} parent=1 // pred_check
      _
    $region15: #{tpu_custom_call.1} parent=1 // pred_check_branch
      %38 = sbr.rel (0) target = $region17
    $region16: #{tpu_custom_call.1} parent=1 // pred_region
      %39 = dma.done [#allocation6], 256
    $region17: #{tpu_custom_call.1} parent=1 // pred_fallthru
      _
    %v40 = vld [vmem:[#allocation2] sm:$0xff]
    %v41 = vld [vmem:[#allocation2 + $0x8] sm:$0xff]
    %v42 = vld [vmem:[#allocation5] sm:$0xff]
    %v43 = vld [vmem:[#allocation5 + $0x8] sm:$0xff]
    %v44 = vand.u32 2147483647, %v40
    %v45 = vand.u32 2147483647, %v41
    %v46 = vsub.f32 0.0, %v44
    %v47 = vsub.f32 0.0, %v45
    %v48 = vmul.f32 %v46, 1.442695
    %v49 = vpow.pop %v48
    %v50 = vmul.f32 %v47, 1.442695
    %v51 = vpow.pop %v50
    %v52 = vmax.f32 %v40, 0.0
    %v53 = vmax.f32 %v41, 0.0
    %v54 = vmul.f32 %v40, %v42
    %v55 = vmul.f32 %v41, %v43
    %v56 = vsub.f32 %v52, %v54
    %v57 = vsub.f32 %v53, %v55
    %v58 = vadd.f32 %v49, 1.0
    %v59 = vlog2.pop %v58
    %v60 = vmul.f32 %v59, 0.6931472
    %v61 = vmul.f32 -0.5, %v49
    %v62 = vadd.f32 %v61, 1.0
    %v63 = vmul.f32 %v62, %v49
    %v64 = vand.u32 2147483647, %v49
    %vm65 = vcmp.lt.f32.partialorder %v64, 0.0004427343
    %v66 = vsel %vm65, %v63, %v60
    %v67 = vadd.f32 %v51, 1.0
    %v68 = vlog2.pop %v67
    %v69 = vmul.f32 %v68, 0.6931472
    %v70 = vmul.f32 -0.5, %v51
    %v71 = vadd.f32 %v70, 1.0
    %v72 = vmul.f32 %v71, %v51
    %v73 = vand.u32 2147483647, %v51
    %vm74 = vcmp.lt.f32.partialorder %v73, 0.0004427343
    %v75 = vsel %vm74, %v72, %v69
    %v76 = vadd.f32 %v56, %v66
    %v77 = vadd.f32 %v57, %v75
    %v78 = vsub.f32 0.0, %v76
    %v79 = vsub.f32 0.0, %v77
    %v80 = vmul.f32 %v78, 1.442695
    %v81 = vpow.pop %v80
    %v82 = vmul.f32 %v79, 1.442695
    %v83 = vpow.pop %v82
    %v84 = vsub.f32 1.0, %v81
    %v85 = vsub.f32 1.0, %v83
    %v86 = vmul.f32 %v84, %v84
    %v87 = vmul.f32 %v85, %v85
    %v88 = vmul.f32 %v86, %v76
    %v89 = vmul.f32 %v87, %v77
    %v90 = vadd.f32 %v88, %v89
    %91 = vst [vmem:[#allocation7] sm:$0xff] %v90
    // Predicated region
    $region18: #{tpu_custom_call.1} parent=1 // pred_check
      _
    $region19: #{tpu_custom_call.1} parent=1 // pred_check_branch
      %93 = sbr.rel (0) target = $region21
    $region20: #{tpu_custom_call.1} parent=1 // pred_region
      %s95 = ssub.s32 128, 128
      %96 = vsyncadd [#allocation4], %s95
      %s98 = sshll.u32 [#allocation7], 4
      %s99 = int_to_ptr.vmem [resolvable:$true] %s98
      %101 = dma.vmem_to_hbm [thread:$0]  %s99, 128, %s2, [#allocation4]
    $region21: #{tpu_custom_call.1} parent=1 // pred_fallthru
      _
    // Predicated region
    $region22: #{tpu_custom_call.1} parent=1 // pred_check
      _
    $region23: #{tpu_custom_call.1} parent=1 // pred_check_branch
      %103 = sbr.rel (0) target = $region25
    $region24: #{tpu_custom_call.1} parent=1 // pred_region
      %104 = dma.done [#allocation4], 128
    $region25: #{tpu_custom_call.1} parent=1 // pred_fallthru
      _
    %105 = vsyncpa [#allocation3], 1
    %106 = vsyncpa [#allocation6], 1
    %107 = vsyncpa [#allocation4], 1

</llo_original>
